<compile_context>
chip_gen: v5e
topology: v5e:2x2
jax: 0.10.0
libtpu: 0.0.40
codegen_flags: <defaults>
</compile_context>

<pallas_src>
import jax
import jax.numpy as jnp
from jax.experimental import pallas as pl
from jax.experimental.pallas import tpu as pltpu


LANE = 128


def _round_up(x, m):
    return (x + m - 1) // m * m


# -----------------------------------------------------------------------------
# Kernel
# -----------------------------------------------------------------------------
def _detector_kernel(
    text_ref, img_ref,
    wt_ref, bt_ref,            # text projection
    wi_ref, bi_ref,            # image projection
    w1a_ref, w1b_ref, b1_ref,  # fusion layer 1 (text-half / image-half of w_fuse1)
    w2_ref, b2_ref,            # fusion layer 2
    wh_ref, bh_ref,            # fused head: [classifier padded to cw | domain layer-1]
    wd2_ref, bd2_ref,          # domain layer-2, shifted so real cols land at [nc:nc+nd)
    out_ref, feat_ref,
):
    f32 = jnp.float32
    bf16 = jnp.bfloat16

    # No-op if the caller already supplies bf16 features (recommended on v6e/v7x).
    x_t = text_ref[...].astype(bf16)
    x_i = img_ref[...].astype(bf16)

    # Projections (bf16 MXU inputs, f32 accumulation).
    tp = jnp.dot(x_t, wt_ref[...], preferred_element_type=f32) + bt_ref[...]
    ip = jnp.dot(x_i, wi_ref[...], preferred_element_type=f32) + bi_ref[...]

    # Fusion 1:  relu(cat(tp, ip) @ W1 + b1)  ==  relu(tp@W1a + ip@W1b + b1)
    h1 = (jnp.dot(tp.astype(bf16), w1a_ref[...], preferred_element_type=f32)
          + jnp.dot(ip.astype(bf16), w1b_ref[...], preferred_element_type=f32)
          + b1_ref[...])
    h1 = jnp.maximum(h1, 0.0)
    # Dropout(0.5): identity in eval-mode forward.

    # Fusion 2.
    h2 = jnp.dot(h1.astype(bf16), w2_ref[...], preferred_element_type=f32) + b2_ref[...]
    h2 = jnp.maximum(h2, 0.0)
    # Dropout(0.3): identity in eval-mode forward.

    feat_ref[...] = h2

    # Fused head: one lane-dense MXU pass -> [class logits padded to cw | domain d1].
    head = jnp.dot(h2.astype(bf16), wh_ref[...], preferred_element_type=f32) + bh_ref[...]
    cw = out_ref.shape[-1]
    cls_packed = head[:, :cw]            # logits at cols [0:nc), zeros elsewhere

    # Gradient reversal is identity in the forward pass.
    d1 = jnp.maximum(head[:, cw:], 0.0)
    # Dropout(0.3): identity in eval-mode forward.

    # Domain layer-2 weight is pre-shifted so its real cols land at [nc:nc+nd); the
    # add packs [logits | domain_logits | 0-pad] into one full-block lane-dense store.
    out_ref[...] = (cls_packed
                    + jnp.dot(d1.astype(bf16), wd2_ref[...], preferred_element_type=f32)
                    + bd2_ref[...])


# -----------------------------------------------------------------------------
# One-time parameter packing (hoisted out of the hot path)
# -----------------------------------------------------------------------------
def prepare_params(params):
    """Pack PyTorch-layout params (stored (in, out)) into kernel-ready arrays."""
    bf16 = jnp.bfloat16
    H = params["w_text"].shape[1]
    h2 = params["w_fuse2"].shape[1]
    h4 = params["w_dom1"].shape[1]
    nc = params["w_cls"].shape[1]
    nd = params["w_dom2"].shape[1]
    cw = _round_up(nc + nd, LANE)        # width of the packed [logits | domain] output

    w1a, w1b = jnp.split(params["w_fuse1"], [H], axis=0)

    # Fused head: [classifier padded to cw | domain layer-1].
    w_cls_pad = jnp.pad(params["w_cls"], ((0, 0), (0, cw - nc)))
    b_cls_pad = jnp.pad(params["b_cls"], ((0, 0), (0, cw - nc)))
    w_head = jnp.concatenate([w_cls_pad, params["w_dom1"]], axis=1)
    b_head = jnp.concatenate([b_cls_pad, params["b_dom1"]], axis=1)

    # Domain layer-2, shifted so its nd real columns land at [nc : nc+nd).
    w_dom2_sh = jnp.pad(params["w_dom2"], ((0, 0), (nc, cw - nc - nd)))
    b_dom2_sh = jnp.pad(params["b_dom2"], ((0, 0), (nc, cw - nc - nd)))

    kp = dict(
        w_text=params["w_text"].astype(bf16), b_text=params["b_text"],
        w_img=params["w_img"].astype(bf16), b_img=params["b_img"],
        w1a=w1a.astype(bf16), w1b=w1b.astype(bf16), b_fuse1=params["b_fuse1"],
        w_fuse2=params["w_fuse2"].astype(bf16), b_fuse2=params["b_fuse2"],
        w_head=w_head.astype(bf16), b_head=b_head,
        w_dom2=w_dom2_sh.astype(bf16), b_dom2=b_dom2_sh,
    )
    meta = dict(nc=nc, nd=nd, cw=cw, h2=h2, h4=h4, hidden=H)
    return kp, meta


# -----------------------------------------------------------------------------
# Tiling helpers
# -----------------------------------------------------------------------------
def _choose_tb(batch, mult, cap):
    """Batch-tile size: multiple of `mult`, <= cap, and >= 2 grid steps when possible."""
    if batch <= mult:
        return batch                      # one full block; nothing to split
    if batch >= 2 * cap:
        return cap
    # Split into (at least) two tiles: keeps both v7x TensorCores busy and gives the
    # software pipeline >= 2 steps so input DMA / output writeback overlap compute.
    return min(cap, _round_up(pl.cdiv(batch, 2), mult))


def _physical_vmem_bytes():
    try:
        return int(getattr(pltpu.get_tpu_info(), "vmem_capacity_bytes", 64 << 20))
    except Exception:
        return 64 << 20                   # conservative (v7x per-TC)


# -----------------------------------------------------------------------------
# Wrapper
# -----------------------------------------------------------------------------
def multimodal_fake_news_detector(text_features, image_features, kp, meta):
    """Fused forward pass. Returns dict with 'logits', 'domain_logits', 'features'."""
    B, text_dim = text_features.shape
    image_dim = image_features.shape[1]
    H = meta["hidden"]
    h2 = meta["h2"]
    h4 = meta["h4"]
    cw = meta["cw"]

    # bf16 inputs need a (16,128) min tile; f32 needs (8,128).
    mult = 16 if min(text_features.dtype.itemsize, image_features.dtype.itemsize) < 4 else 8

    phys_vmem = _physical_vmem_bytes()
    cap = 1024 if phys_vmem >= (96 << 20) else 512   # v5e/v6e: 128 MiB -> 1024; v7x: 512
    TB = _choose_tb(B, mult, cap)
    grid = (pl.cdiv(B, TB),)

    def batch_spec(width):
        return pl.BlockSpec((TB, width), lambda i: (i, 0))

    def resident_spec(arr):  # weight/bias stays in VMEM across all batch tiles
        return pl.BlockSpec(arr.shape, lambda i: (0, 0))

    weight_args = (
        kp["w_text"], kp["b_text"], kp["w_img"], kp["b_img"],
        kp["w1a"], kp["w1b"], kp["b_fuse1"],
        kp["w_fuse2"], kp["b_fuse2"],
        kp["w_head"], kp["b_head"],
        kp["w_dom2"], kp["b_dom2"],
    )

    in_specs = [batch_spec(text_dim), batch_spec(image_dim)]
    in_specs += [resident_spec(a) for a in weight_args]

    out_specs = (batch_spec(cw), batch_spec(h2))
    out_shape = (
        jax.ShapeDtypeStruct((B, cw), jnp.float32),   # packed [logits | domain | 0-pad]
        jax.ShapeDtypeStruct((B, h2), jnp.float32),   # fused features
    )

    # VMEM limit derived from the actual footprint (+ slack), clamped to physical.
    weight_bytes = sum(int(a.size) * a.dtype.itemsize for a in weight_args)
    in_tile_bytes = TB * (text_dim * text_features.dtype.itemsize
                          + image_dim * image_features.dtype.itemsize)
    out_tile_bytes = TB * (cw + h2) * 4
    need = weight_bytes + 2 * (in_tile_bytes + out_tile_bytes)   # double-buffered tiles
    vmem_limit = int(need * 1.3) + (8 << 20)                     # slack + compiler scratch
    vmem_limit = max(32 << 20, min(vmem_limit, int(phys_vmem * 0.9)))

    flops = 2 * B * (text_dim * H + image_dim * H + 2 * H * H + H * h2
                     + h2 * (cw + h4) + h4 * cw)
    bytes_accessed = (B * (text_dim * text_features.dtype.itemsize
                           + image_dim * image_features.dtype.itemsize)
                      + 4 * B * (cw + h2) + weight_bytes)

    packed, features = pl.pallas_call(
        _detector_kernel,
        out_shape=out_shape,
        grid_spec=pltpu.PrefetchScalarGridSpec(
            num_scalar_prefetch=0,
            grid=grid,
            in_specs=in_specs,
            out_specs=out_specs,
        ),
        compiler_params=pltpu.CompilerParams(
            dimension_semantics=("parallel",),
            vmem_limit_bytes=vmem_limit,
        ),
        cost_estimate=pl.CostEstimate(
            flops=flops, transcendentals=0, bytes_accessed=bytes_accessed),
    )(text_features, image_features, *weight_args)

    nc, nd = meta["nc"], meta["nd"]
    return {
        "logits": packed[:, :nc],
        "domain_logits": packed[:, nc:nc + nd],
        "features": features,
    }


# -----------------------------------------------------------------------------
# Init + references
# -----------------------------------------------------------------------------
def init_params(key, text_dim, image_dim, hidden_dim, num_classes, num_domains=5):
    """Deterministic PyTorch-Linear-style init. Weights stored (in, out)."""
    def linear(key, fan_in, fan_out):
        k1, k2 = jax.random.split(key)
        bound = 1.0 / jnp.sqrt(fan_in)
        w = jax.random.uniform(k1, (fan_in, fan_out), jnp.float32, -bound, bound)
        b = jax.random.uniform(k2, (1, fan_out), jnp.float32, -bound, bound)
        return w, b

    keys = jax.random.split(key, 7)
    h2 = hidden_dim // 2
    h4 = hidden_dim // 4
    p = {}
    p["w_text"], p["b_text"] = linear(keys[0], text_dim, hidden_dim)
    p["w_img"], p["b_img"] = linear(keys[1], image_dim, hidden_dim)
    p["w_fuse1"], p["b_fuse1"] = linear(keys[2], 2 * hidden_dim, hidden_dim)
    p["w_fuse2"], p["b_fuse2"] = linear(keys[3], hidden_dim, h2)
    p["w_cls"], p["b_cls"] = linear(keys[4], h2, num_classes)
    p["w_dom1"], p["b_dom1"] = linear(keys[5], h2, h4)
    p["w_dom2"], p["b_dom2"] = linear(keys[6], h4, num_domains)
    return p


def reference_forward_f32(text_features, image_features, params):
    """Pure-JAX f32 reference mirroring the PyTorch forward (eval mode)."""
    tp = text_features @ params["w_text"] + params["b_text"]
    ip = image_features @ params["w_img"] + params["b_img"]
    combined = jnp.concatenate([tp, ip], axis=1)
    h1 = jnp.maximum(combined @ params["w_fuse1"] + params["b_fuse1"], 0.0)
    h2 = jnp.maximum(h1 @ params["w_fuse2"] + params["b_fuse2"], 0.0)
    logits = h2 @ params["w_cls"] + params["b_cls"]
    d1 = jnp.maximum(h2 @ params["w_dom1"] + params["b_dom1"], 0.0)
    domain_logits = d1 @ params["w_dom2"] + params["b_dom2"]
    return {"logits": logits, "domain_logits": domain_logits, "features": h2}


def reference_forward_bf16(text_features, image_features, kp, meta):
    """Pure-JAX reference with the same bf16-input / f32-accumulate numerics as the kernel."""
    bf16 = jnp.bfloat16
    f32 = jnp.float32

    def mm(x, w):
        return jnp.dot(x.astype(bf16), w, preferred_element_type=f32)

    tp = mm(text_features, kp["w_text"]) + kp["b_text"]
    ip = mm(image_features, kp["w_img"]) + kp["b_img"]
    h1 = jnp.maximum(mm(tp, kp["w1a"]) + mm(ip, kp["w1b"]) + kp["b_fuse1"], 0.0)
    h2 = jnp.maximum(mm(h1, kp["w_fuse2"]) + kp["b_fuse2"], 0.0)
    head = mm(h2, kp["w_head"]) + kp["b_head"]
    cw, nc, nd = meta["cw"], meta["nc"], meta["nd"]
    d1 = jnp.maximum(head[:, cw:], 0.0)
    packed = head[:, :cw] + mm(d1, kp["w_dom2"]) + kp["b_dom2"]
    return {"logits": packed[:, :nc],
            "domain_logits": packed[:, nc:nc + nd],
            "features": h2}


# -----------------------------------------------------------------------------
# Demo / correctness check
# -----------------------------------------------------------------------------
if __name__ == "__main__":
    # Small shapes consistent with the module (scaled-down dims).
    B = 16             # gives TB=8 -> a 2-step grid even at demo scale
    TEXT_DIM = 64      # stands in for 768
    IMAGE_DIM = 128    # stands in for 2048
    HIDDEN_DIM = 64    # stands in for 512
    NUM_CLASSES = 2
    NUM_DOMAINS = 5

    key = jax.random.PRNGKey(0)
    k_text, k_img, k_params = jax.random.split(key, 3)

    text_features = jax.random.normal(k_text, (B, TEXT_DIM), jnp.float32)
    image_features = jax.random.normal(k_img, (B, IMAGE_DIM), jnp.float32)
    params = init_params(k_params, TEXT_DIM, IMAGE_DIM, HIDDEN_DIM, NUM_CLASSES, NUM_DOMAINS)

    # One-time packing (split w_fuse1, fuse + pad/shift heads, cast weights to bf16).
    kernel_params, meta = prepare_params(params)

    out = multimodal_fake_news_detector(text_features, image_features, kernel_params, meta)
    out = jax.block_until_ready(out)

    # Exact-numerics check against a bf16/f32-accumulate JAX reference.
    ref_bf16 = reference_forward_bf16(text_features, image_features, kernel_params, meta)
    for name in ("logits", "domain_logits", "features"):
        assert out[name].shape == ref_bf16[name].shape, name
        assert jnp.allclose(out[name], ref_bf16[name], atol=2e-3, rtol=2e-3), name

    # Sanity check against the full-f32 PyTorch-semantics reference (loose tol: bf16 weights).
    ref_f32 = reference_forward_f32(text_features, image_features, params)
    for name in ("logits", "domain_logits", "features"):
        assert jnp.allclose(out[name], ref_f32[name], atol=1e-1, rtol=1e-1), name

    print("KERNEL_OK")
</pallas_src>

<mosaic_0001>
module attributes {stable_mosaic.version = 11 : i64} {
  func.func @_detector_kernel(%arg0: i32, %arg1: memref<8x64xf32, #tpu.memory_space<vmem>>, %arg2: memref<8x128xf32, #tpu.memory_space<vmem>>, %arg3: memref<64x64xbf16, #tpu.memory_space<vmem>>, %arg4: memref<1x64xf32, #tpu.memory_space<vmem>>, %arg5: memref<128x64xbf16, #tpu.memory_space<vmem>>, %arg6: memref<1x64xf32, #tpu.memory_space<vmem>>, %arg7: memref<64x64xbf16, #tpu.memory_space<vmem>>, %arg8: memref<64x64xbf16, #tpu.memory_space<vmem>>, %arg9: memref<1x64xf32, #tpu.memory_space<vmem>>, %arg10: memref<64x32xbf16, #tpu.memory_space<vmem>>, %arg11: memref<1x32xf32, #tpu.memory_space<vmem>>, %arg12: memref<32x144xbf16, #tpu.memory_space<vmem>>, %arg13: memref<1x144xf32, #tpu.memory_space<vmem>>, %arg14: memref<16x128xbf16, #tpu.memory_space<vmem>>, %arg15: memref<1x128xf32, #tpu.memory_space<vmem>>, %arg16: memref<8x128xf32, #tpu.memory_space<vmem>>, %arg17: memref<8x32xf32, #tpu.memory_space<vmem>>) attributes {dimension_semantics = [#tpu.dimension_semantics<parallel>], iteration_bounds = array<i64: 2>, scalar_prefetch = 0 : i64, scratch_operands = 0 : i64, tpu.core_type = #tpu.core_type<tc>, window_params = [{transform_indices = @transform_0, window_bounds = array<i64: 8, 64>}, {transform_indices = @transform_1, window_bounds = array<i64: 8, 128>}, {pipeline_mode = #tpu.pipeline_mode<synchronous>, transform_indices = @transform_2, window_bounds = array<i64: 64, 64>}, {pipeline_mode = #tpu.pipeline_mode<synchronous>, transform_indices = @transform_3, window_bounds = array<i64: 1, 64>}, {pipeline_mode = #tpu.pipeline_mode<synchronous>, transform_indices = @transform_4, window_bounds = array<i64: 128, 64>}, {pipeline_mode = #tpu.pipeline_mode<synchronous>, transform_indices = @transform_5, window_bounds = array<i64: 1, 64>}, {pipeline_mode = #tpu.pipeline_mode<synchronous>, transform_indices = @transform_6, window_bounds = array<i64: 64, 64>}, {pipeline_mode = #tpu.pipeline_mode<synchronous>, transform_indices = @transform_7, window_bounds = array<i64: 64, 64>}, {pipeline_mode = #tpu.pipeline_mode<synchronous>, transform_indices = @transform_8, window_bounds = array<i64: 1, 64>}, {pipeline_mode = #tpu.pipeline_mode<synchronous>, transform_indices = @transform_9, window_bounds = array<i64: 64, 32>}, {pipeline_mode = #tpu.pipeline_mode<synchronous>, transform_indices = @transform_10, window_bounds = array<i64: 1, 32>}, {pipeline_mode = #tpu.pipeline_mode<synchronous>, transform_indices = @transform_11, window_bounds = array<i64: 32, 144>}, {pipeline_mode = #tpu.pipeline_mode<synchronous>, transform_indices = @transform_12, window_bounds = array<i64: 1, 144>}, {pipeline_mode = #tpu.pipeline_mode<synchronous>, transform_indices = @transform_13, window_bounds = array<i64: 16, 128>}, {pipeline_mode = #tpu.pipeline_mode<synchronous>, transform_indices = @transform_14, window_bounds = array<i64: 1, 128>}, {transform_indices = @transform_15, window_bounds = array<i64: 8, 128>}, {transform_indices = @transform_16, window_bounds = array<i64: 8, 32>}]} {
    %c0 = arith.constant 0 : index
    %c0_0 = arith.constant 0 : index
    %0 = vector.load %arg1[%c0, %c0_0] : memref<8x64xf32, #tpu.memory_space<vmem>>, vector<8x64xf32>
    %1 = arith.truncf %0 : vector<8x64xf32> to vector<8x64xbf16>
    %c0_1 = arith.constant 0 : index
    %c0_2 = arith.constant 0 : index
    %2 = vector.load %arg2[%c0_1, %c0_2] : memref<8x128xf32, #tpu.memory_space<vmem>>, vector<8x128xf32>
    %3 = arith.truncf %2 : vector<8x128xf32> to vector<8x128xbf16>
    %c0_3 = arith.constant 0 : index
    %c0_4 = arith.constant 0 : index
    %4 = vector.load %arg3[%c0_3, %c0_4] : memref<64x64xbf16, #tpu.memory_space<vmem>>, vector<64x64xbf16>
    %cst = arith.constant dense<0.000000e+00> : vector<8x64xf32>
    %5 = tpu.matmul %1, %4, %cst {dimension_numbers = #tpu.dot_dimension_numbers<[1], [0], [0], [1], [0, 0, 1, 1], [], []>} : vector<8x64xbf16>, vector<64x64xbf16>, vector<8x64xf32> -> vector<8x64xf32>
    %c0_5 = arith.constant 0 : index
    %c0_6 = arith.constant 0 : index
    %6 = vector.load %arg4[%c0_5, %c0_6] : memref<1x64xf32, #tpu.memory_space<vmem>>, vector<1x64xf32>
    %7 = vector.broadcast %6 : vector<1x64xf32> to vector<8x64xf32>
    %8 = arith.addf %5, %7 : vector<8x64xf32>
    %c0_7 = arith.constant 0 : index
    %c0_8 = arith.constant 0 : index
    %9 = vector.load %arg5[%c0_7, %c0_8] : memref<128x64xbf16, #tpu.memory_space<vmem>>, vector<128x64xbf16>
    %cst_9 = arith.constant dense<0.000000e+00> : vector<8x64xf32>
    %10 = tpu.matmul %3, %9, %cst_9 {dimension_numbers = #tpu.dot_dimension_numbers<[1], [0], [0], [1], [0, 0, 1, 1], [], []>} : vector<8x128xbf16>, vector<128x64xbf16>, vector<8x64xf32> -> vector<8x64xf32>
    %c0_10 = arith.constant 0 : index
    %c0_11 = arith.constant 0 : index
    %11 = vector.load %arg6[%c0_10, %c0_11] : memref<1x64xf32, #tpu.memory_space<vmem>>, vector<1x64xf32>
    %12 = vector.broadcast %11 : vector<1x64xf32> to vector<8x64xf32>
    %13 = arith.addf %10, %12 : vector<8x64xf32>
    %14 = arith.truncf %8 : vector<8x64xf32> to vector<8x64xbf16>
    %c0_12 = arith.constant 0 : index
    %c0_13 = arith.constant 0 : index
    %15 = vector.load %arg7[%c0_12, %c0_13] : memref<64x64xbf16, #tpu.memory_space<vmem>>, vector<64x64xbf16>
    %cst_14 = arith.constant dense<0.000000e+00> : vector<8x64xf32>
    %16 = tpu.matmul %14, %15, %cst_14 {dimension_numbers = #tpu.dot_dimension_numbers<[1], [0], [0], [1], [0, 0, 1, 1], [], []>} : vector<8x64xbf16>, vector<64x64xbf16>, vector<8x64xf32> -> vector<8x64xf32>
    %17 = arith.truncf %13 : vector<8x64xf32> to vector<8x64xbf16>
    %c0_15 = arith.constant 0 : index
    %c0_16 = arith.constant 0 : index
    %18 = vector.load %arg8[%c0_15, %c0_16] : memref<64x64xbf16, #tpu.memory_space<vmem>>, vector<64x64xbf16>
    %cst_17 = arith.constant dense<0.000000e+00> : vector<8x64xf32>
    %19 = tpu.matmul %17, %18, %cst_17 {dimension_numbers = #tpu.dot_dimension_numbers<[1], [0], [0], [1], [0, 0, 1, 1], [], []>} : vector<8x64xbf16>, vector<64x64xbf16>, vector<8x64xf32> -> vector<8x64xf32>
    %20 = arith.addf %16, %19 : vector<8x64xf32>
    %c0_18 = arith.constant 0 : index
    %c0_19 = arith.constant 0 : index
    %21 = vector.load %arg9[%c0_18, %c0_19] : memref<1x64xf32, #tpu.memory_space<vmem>>, vector<1x64xf32>
    %22 = vector.broadcast %21 : vector<1x64xf32> to vector<8x64xf32>
    %23 = arith.addf %20, %22 : vector<8x64xf32>
    %cst_20 = arith.constant 0.000000e+00 : f32
    %24 = vector.broadcast %cst_20 : f32 to vector<8x64xf32>
    %25 = arith.maximumf %23, %24 : vector<8x64xf32>
    %26 = arith.truncf %25 : vector<8x64xf32> to vector<8x64xbf16>
    %c0_21 = arith.constant 0 : index
    %c0_22 = arith.constant 0 : index
    %27 = vector.load %arg10[%c0_21, %c0_22] : memref<64x32xbf16, #tpu.memory_space<vmem>>, vector<64x32xbf16>
    %cst_23 = arith.constant dense<0.000000e+00> : vector<8x32xf32>
    %28 = tpu.matmul %26, %27, %cst_23 {dimension_numbers = #tpu.dot_dimension_numbers<[1], [0], [0], [1], [0, 0, 1, 1], [], []>} : vector<8x64xbf16>, vector<64x32xbf16>, vector<8x32xf32> -> vector<8x32xf32>
    %c0_24 = arith.constant 0 : index
    %c0_25 = arith.constant 0 : index
    %29 = vector.load %arg11[%c0_24, %c0_25] : memref<1x32xf32, #tpu.memory_space<vmem>>, vector<1x32xf32>
    %30 = vector.broadcast %29 : vector<1x32xf32> to vector<8x32xf32>
    %31 = arith.addf %28, %30 : vector<8x32xf32>
    %cst_26 = arith.constant 0.000000e+00 : f32
    %32 = vector.broadcast %cst_26 : f32 to vector<8x32xf32>
    %33 = arith.maximumf %31, %32 : vector<8x32xf32>
    %c0_27 = arith.constant 0 : index
    %c0_28 = arith.constant 0 : index
    %34 = vector.load %arg17[%c0_27, %c0_28] : memref<8x32xf32, #tpu.memory_space<vmem>>, vector<8x32xf32>
    tpu.vector_store %arg17[%c0_27, %c0_28], %33 {strides = array<i32>} : memref<8x32xf32, #tpu.memory_space<vmem>>, vector<8x32xf32>,
    %35 = arith.truncf %33 : vector<8x32xf32> to vector<8x32xbf16>
    %c0_29 = arith.constant 0 : index
    %c0_30 = arith.constant 0 : index
    %36 = vector.load %arg12[%c0_29, %c0_30] : memref<32x144xbf16, #tpu.memory_space<vmem>>, vector<32x144xbf16>
    %cst_31 = arith.constant dense<0.000000e+00> : vector<8x144xf32>
    %37 = tpu.matmul %35, %36, %cst_31 {dimension_numbers = #tpu.dot_dimension_numbers<[1], [0], [0], [1], [0, 0, 1, 1], [], []>} : vector<8x32xbf16>, vector<32x144xbf16>, vector<8x144xf32> -> vector<8x144xf32>
    %c0_32 = arith.constant 0 : index
    %c0_33 = arith.constant 0 : index
    %38 = vector.load %arg13[%c0_32, %c0_33] : memref<1x144xf32, #tpu.memory_space<vmem>>, vector<1x144xf32>
    %39 = vector.broadcast %38 : vector<1x144xf32> to vector<8x144xf32>
    %40 = arith.addf %37, %39 : vector<8x144xf32>
    %41 = vector.extract_strided_slice %40 {offsets = [0, 0], sizes = [8, 128], strides = [1, 1]} : vector<8x144xf32> to vector<8x128xf32>
    %42 = vector.extract_strided_slice %40 {offsets = [0, 128], sizes = [8, 16], strides = [1, 1]} : vector<8x144xf32> to vector<8x16xf32>
    %cst_34 = arith.constant 0.000000e+00 : f32
    %43 = vector.broadcast %cst_34 : f32 to vector<8x16xf32>
    %44 = arith.maximumf %42, %43 : vector<8x16xf32>
    %45 = arith.truncf %44 : vector<8x16xf32> to vector<8x16xbf16>
    %c0_35 = arith.constant 0 : index
    %c0_36 = arith.constant 0 : index
    %46 = vector.load %arg14[%c0_35, %c0_36] : memref<16x128xbf16, #tpu.memory_space<vmem>>, vector<16x128xbf16>
    %cst_37 = arith.constant dense<0.000000e+00> : vector<8x128xf32>
    %47 = tpu.matmul %45, %46, %cst_37 {dimension_numbers = #tpu.dot_dimension_numbers<[1], [0], [0], [1], [0, 0, 1, 1], [], []>} : vector<8x16xbf16>, vector<16x128xbf16>, vector<8x128xf32> -> vector<8x128xf32>
    %48 = arith.addf %41, %47 : vector<8x128xf32>
    %c0_38 = arith.constant 0 : index
    %c0_39 = arith.constant 0 : index
    %49 = vector.load %arg15[%c0_38, %c0_39] : memref<1x128xf32, #tpu.memory_space<vmem>>, vector<1x128xf32>
    %50 = vector.broadcast %49 : vector<1x128xf32> to vector<8x128xf32>
    %51 = arith.addf %48, %50 : vector<8x128xf32>
    %c0_40 = arith.constant 0 : index
    %c0_41 = arith.constant 0 : index
    %52 = vector.load %arg16[%c0_40, %c0_41] : memref<8x128xf32, #tpu.memory_space<vmem>>, vector<8x128xf32>
    tpu.vector_store %arg16[%c0_40, %c0_41], %51 {strides = array<i32>} : memref<8x128xf32, #tpu.memory_space<vmem>>, vector<8x128xf32>,
    return
  }
  func.func @transform_0(%arg0: i32) -> (i32, i32) {
    %c0_i32 = arith.constant 0 : i32
    %c0_i32_0 = arith.constant 0 : i32
    return %arg0, %c0_i32 : i32, i32
  }
  func.func @transform_1(%arg0: i32) -> (i32, i32) {
    %c0_i32 = arith.constant 0 : i32
    %c0_i32_0 = arith.constant 0 : i32
    return %arg0, %c0_i32 : i32, i32
  }
  func.func @transform_2(%arg0: i32) -> (i32, i32) {
    %c0_i32 = arith.constant 0 : i32
    %c0_i32_0 = arith.constant 0 : i32
    %c0_i32_1 = arith.constant 0 : i32
    return %c0_i32, %c0_i32_0 : i32, i32
  }
  func.func @transform_3(%arg0: i32) -> (i32, i32) {
    %c0_i32 = arith.constant 0 : i32
    %c0_i32_0 = arith.constant 0 : i32
    %c0_i32_1 = arith.constant 0 : i32
    return %c0_i32, %c0_i32_0 : i32, i32
  }
  func.func @transform_4(%arg0: i32) -> (i32, i32) {
    %c0_i32 = arith.constant 0 : i32
    %c0_i32_0 = arith.constant 0 : i32
    %c0_i32_1 = arith.constant 0 : i32
    return %c0_i32, %c0_i32_0 : i32, i32
  }
  func.func @transform_5(%arg0: i32) -> (i32, i32) {
    %c0_i32 = arith.constant 0 : i32
    %c0_i32_0 = arith.constant 0 : i32
    %c0_i32_1 = arith.constant 0 : i32
    return %c0_i32, %c0_i32_0 : i32, i32
  }
  func.func @transform_6(%arg0: i32) -> (i32, i32) {
    %c0_i32 = arith.constant 0 : i32
    %c0_i32_0 = arith.constant 0 : i32
    %c0_i32_1 = arith.constant 0 : i32
    return %c0_i32, %c0_i32_0 : i32, i32
  }
  func.func @transform_7(%arg0: i32) -> (i32, i32) {
    %c0_i32 = arith.constant 0 : i32
    %c0_i32_0 = arith.constant 0 : i32
    %c0_i32_1 = arith.constant 0 : i32
    return %c0_i32, %c0_i32_0 : i32, i32
  }
  func.func @transform_8(%arg0: i32) -> (i32, i32) {
    %c0_i32 = arith.constant 0 : i32
    %c0_i32_0 = arith.constant 0 : i32
    %c0_i32_1 = arith.constant 0 : i32
    return %c0_i32, %c0_i32_0 : i32, i32
  }
  func.func @transform_9(%arg0: i32) -> (i32, i32) {
    %c0_i32 = arith.constant 0 : i32
    %c0_i32_0 = arith.constant 0 : i32
    %c0_i32_1 = arith.constant 0 : i32
    return %c0_i32, %c0_i32_0 : i32, i32
  }
  func.func @transform_10(%arg0: i32) -> (i32, i32) {
    %c0_i32 = arith.constant 0 : i32
    %c0_i32_0 = arith.constant 0 : i32
    %c0_i32_1 = arith.constant 0 : i32
    return %c0_i32, %c0_i32_0 : i32, i32
  }
  func.func @transform_11(%arg0: i32) -> (i32, i32) {
    %c0_i32 = arith.constant 0 : i32
    %c0_i32_0 = arith.constant 0 : i32
    %c0_i32_1 = arith.constant 0 : i32
    return %c0_i32, %c0_i32_0 : i32, i32
  }
  func.func @transform_12(%arg0: i32) -> (i32, i32) {
    %c0_i32 = arith.constant 0 : i32
    %c0_i32_0 = arith.constant 0 : i32
    %c0_i32_1 = arith.constant 0 : i32
    return %c0_i32, %c0_i32_0 : i32, i32
  }
  func.func @transform_13(%arg0: i32) -> (i32, i32) {
    %c0_i32 = arith.constant 0 : i32
    %c0_i32_0 = arith.constant 0 : i32
    %c0_i32_1 = arith.constant 0 : i32
    return %c0_i32, %c0_i32_0 : i32, i32
  }
  func.func @transform_14(%arg0: i32) -> (i32, i32) {
    %c0_i32 = arith.constant 0 : i32
    %c0_i32_0 = arith.constant 0 : i32
    %c0_i32_1 = arith.constant 0 : i32
    return %c0_i32, %c0_i32_0 : i32, i32
  }
  func.func @transform_15(%arg0: i32) -> (i32, i32) {
    %c0_i32 = arith.constant 0 : i32
    %c0_i32_0 = arith.constant 0 : i32
    return %arg0, %c0_i32 : i32, i32
  }
  func.func @transform_16(%arg0: i32) -> (i32, i32) {
    %c0_i32 = arith.constant 0 : i32
    %c0_i32_0 = arith.constant 0 : i32
    return %arg0, %c0_i32 : i32, i32
  }
}

</mosaic_0001>

<llo_original>
// kernel: tpu_custom_call.1
$region0: #{tpu_custom_call.1}
  #allocation0 [shape = 'u32[]', space=smem, size = 0x4, offset = 0x4, fixed_abs, tag = 'smem constant byte address 0x4 - core index']
  #allocation1 [shape = 'u32[72,128]{1,0:T(1,128)}', space=vmem, size = 0x9000, scoped, tag = 'internal scratch']
  %s0 = inlined_call_operand.vmem [shape: f32[16,64], index: 0, kind: input, shape index: {}]
  %s1 = inlined_call_operand.hbm [shape: f32[16,128], index: 1, kind: input, shape index: {}]
  %s2 = inlined_call_operand.vmem [shape: bf16[64,64], index: 2, kind: input, shape index: {}]
  %s3 = inlined_call_operand.vmem [shape: f32[1,64], index: 3, kind: input, shape index: {}]
  %s4 = inlined_call_operand.vmem [shape: bf16[128,64], index: 4, kind: input, shape index: {}]
  %s5 = inlined_call_operand.hbm [shape: f32[1,64], index: 5, kind: input, shape index: {}]
  %s6 = inlined_call_operand.vmem [shape: bf16[64,64], index: 6, kind: input, shape index: {}]
  %s7 = inlined_call_operand.vmem [shape: bf16[64,64], index: 7, kind: input, shape index: {}]
  %s8 = inlined_call_operand.hbm [shape: f32[1,64], index: 8, kind: input, shape index: {}]
  %s9 = inlined_call_operand.vmem [shape: bf16[64,32], index: 9, kind: input, shape index: {}]
  %s10 = inlined_call_operand.hbm [shape: f32[1,32], index: 10, kind: input, shape index: {}]
  %s11 = inlined_call_operand.vmem [shape: bf16[32,144], index: 11, kind: input, shape index: {}]
  %s12 = inlined_call_operand.vmem [shape: f32[1,144], index: 12, kind: input, shape index: {}]
  %s13 = inlined_call_operand.vmem [shape: bf16[16,128], index: 13, kind: input, shape index: {}]
  %s14 = inlined_call_operand.vmem [shape: f32[1,128], index: 14, kind: input, shape index: {}]
  %s15 = inlined_call_operand.hbm [shape: f32[16,128], index: 15, kind: output, shape index: {0}]
  %s16 = inlined_call_operand.hbm [shape: f32[16,32], index: 16, kind: output, shape index: {1}]
  %17 = xla_tuple %s15, %s16
  %s18 = sld [smem:[#allocation0]]
  $region117: #{tpu_custom_call.1} parent=0
    _
  %s20 = ssub.s32 1, %s18
  %s21 = scalar_select 0, %s20, %s18
  $region1: #{tpu_custom_call.1} parent=0
    #allocation2 [shape = 'u8[8192]{0}', space=vmem, size = 0x2000, scoped, tag = 'input window, operand 1']
    #allocation3 [shape = 's32[2]{0}', space=sflag, size = 0x8, scoped, tag = 'scoped memory for tpu_custom_call.1']
    #allocation4 [shape = 's32[2]{0}', space=sflag, size = 0x8, scoped, tag = 'scoped memory for tpu_custom_call.1']
    #allocation5 [shape = 'u8[512]{0}', space=vmem, size = 0x400, scoped, tag = 'input window, operand 5, single buffered']
    #allocation6 [shape = 's32[1]{0}', space=sflag, size = 0x4, scoped, tag = 'scoped memory for tpu_custom_call.1']
    #allocation7 [shape = 'u8[512]{0}', space=vmem, size = 0x400, scoped, tag = 'input window, operand 8, single buffered']
    #allocation8 [shape = 'u8[512]{0}', space=vmem, size = 0x400, scoped, tag = 'input window, operand 10, single buffered']
    #allocation9 [shape = 's32[1]{0}', space=sflag, size = 0x4, scoped, tag = 'scoped memory for tpu_custom_call.1']
    #allocation10 [shape = 'u8[8192]{0}', space=vmem, size = 0x2000, scoped, tag = 'output window, operand 0']
    #allocation11 [shape = 'u8[8192]{0}', space=vmem, size = 0x2000, scoped, tag = 'output window, operand 1']
    #allocation12 [shape = 's32[2]{0}', space=sflag, size = 0x8, scoped, tag = 'scoped memory for tpu_custom_call.1']
    %22 = vsyncpa [#allocation3], 0
    %s23 = scalar_lea.sflag [#allocation3], 1
    %24 = vsyncpa %s23, 0
    %25 = vsyncpa [#allocation6], 0
    %26 = vsyncpa [#allocation9], 0
    %27 = vsyncpa [#allocation4], 0
    %s28 = scalar_lea.sflag [#allocation4], 1
    %29 = vsyncpa %s28, 0
    %30 = vsyncpa [#allocation12], 0
    %s31 = scalar_lea.sflag [#allocation12], 1
    %32 = vsyncpa %s31, 0
    loop: start=0, step=1, limit=4
    $region2: #{tpu_custom_call.1} parent=1 // loop_pre_header
      _
    $region3: #{tpu_custom_call.1} parent=1 // loop_header
      %s34 = sphi 0, %s38
      %p35 = scmp.ge.s32.totalorder %s34, 4
      %s44 = sphi 0, %s46
      %s47 = sphi 0, %s44
      %s48 = sphi 0, %s47
      %s64 = sphi 0, %s48
      %s70 = sphi 0, %s72
      %s73 = sphi 0, %s70
      %s74 = sphi 0, %s73
      %s90 = sphi 0, %s74
      %s94 = sphi 0, %s94
      %s96 = sphi 0, %s94
      %s97 = sphi 0, %s96
      %s111 = sphi 0, %s97
      %s115 = sphi 0, %s115
      %s117 = sphi 0, %s115
      %s118 = sphi 0, %s117
      %s132 = sphi 0, %s118
      %s136 = sphi 0, %s136
      %s138 = sphi 0, %s136
      %s139 = sphi 0, %s138
      %s153 = sphi 0, %s139
      %s157 = sphi 0, %s157
      %s159 = sphi 0, %s157
      %s160 = sphi 0, %s159
      %s174 = sphi 0, %s160
      %s178 = sphi 0, %s178
      %s180 = sphi 0, %s178
      %s181 = sphi 0, %s180
      %s195 = sphi 0, %s181
      %s199 = sphi 0, %s199
      %s201 = sphi 0, %s199
      %s202 = sphi 0, %s201
      %s216 = sphi 0, %s202
      %s220 = sphi 0, %s220
      %s222 = sphi 0, %s220
      %s223 = sphi 0, %s222
      %s237 = sphi 0, %s223
      %s241 = sphi 0, %s241
      %s243 = sphi 0, %s241
      %s244 = sphi 0, %s243
      %s258 = sphi 0, %s244
      %s262 = sphi 0, %s262
      %s264 = sphi 0, %s262
      %s265 = sphi 0, %s264
      %s279 = sphi 0, %s265
      %s283 = sphi 0, %s283
      %s285 = sphi 0, %s283
      %s286 = sphi 0, %s285
      %s300 = sphi 0, %s286
      %s304 = sphi 0, %s304
      %s306 = sphi 0, %s304
      %s307 = sphi 0, %s306
      %s321 = sphi 0, %s307
      %s325 = sphi 0, %s325
      %s327 = sphi 0, %s325
      %s328 = sphi 0, %s327
      %s342 = sphi 0, %s328
      %s346 = sphi 0, %s346
      %s348 = sphi 0, %s346
      %s349 = sphi 0, %s348
      %s363 = sphi 0, %s349
      %s369 = sphi 0, %s371
      %s372 = sphi 0, %s369
      %s373 = sphi 0, %s372
      %s389 = sphi 0, %s373
      %s395 = sphi 0, %s397
      %s398 = sphi 0, %s395
      %s399 = sphi 0, %s398
      %s415 = sphi 0, %s399
    $region4: #{tpu_custom_call.1} parent=1 // loop_header_branch
      %37 = sbr.rel (%p35) target = $region8
    $region5: #{tpu_custom_call.1} parent=1 // loop_body
      %s39 = ssub.s32 %s34, 1
      %s40 = ssub.s32 %s34, 2
      %s41 = sadd.s32 %s34, 1
      %s42 = ssub.s32 %s34, %s41
      %p43 = scmp.eq.s32.totalorder %s42, 0
      %s45 = sadd.s32 %s44, 1
      %s46 = scalar_select %p43, %s44, %s45
      %p49 = pneg %p43
      %p50 = scmp.eq.s32.totalorder %s34, 1
      %p51 = por %p49, %p50
      %p52 = scmp.ne.s32.totalorder %s44, %s47
      %p53 = scmp.eq.s32.totalorder %s34, 0
      %p54 = por %p52, %p53
      %p55 = scmp.ne.s32.totalorder %s44, %s47
      %p56 = scmp.eq.s32.totalorder %s39, 1
      %p57 = por %p55, %p56
      %p58 = scmp.ne.s32.totalorder %s47, %s48
      %p59 = scmp.eq.s32.totalorder %s39, 0
      %p60 = por %p58, %p59
      %p61 = scmp.ne.s32.totalorder %s47, %s48
      %p62 = scmp.eq.s32.totalorder %s40, 1
      %p63 = por %p61, %p62
      %p65 = scmp.ne.s32.totalorder %s48, %s64
      %p66 = scmp.eq.s32.totalorder %s40, 0
      %p67 = por %p65, %p66
      %s68 = ssub.s32 %s34, %s41
      %p69 = scmp.eq.s32.totalorder %s68, 0
      %s71 = sadd.s32 %s70, 1
      %s72 = scalar_select %p69, %s70, %s71
      %p75 = pneg %p69
      %p76 = scmp.eq.s32.totalorder %s34, 1
      %p77 = por %p75, %p76
      %p78 = scmp.ne.s32.totalorder %s70, %s73
      %p79 = scmp.eq.s32.totalorder %s34, 0
      %p80 = por %p78, %p79
      %p81 = scmp.ne.s32.totalorder %s70, %s73
      %p82 = scmp.eq.s32.totalorder %s39, 1
      %p83 = por %p81, %p82
      %p84 = scmp.ne.s32.totalorder %s73, %s74
      %p85 = scmp.eq.s32.totalorder %s39, 0
      %p86 = por %p84, %p85
      %p87 = scmp.ne.s32.totalorder %s73, %s74
      %p88 = scmp.eq.s32.totalorder %s40, 1
      %p89 = por %p87, %p88
      %p91 = scmp.ne.s32.totalorder %s74, %s90
      %p92 = scmp.eq.s32.totalorder %s40, 0
      %p93 = por %p91, %p92
      %s95 = sadd.s32 %s94, 1
      %p98 = scmp.eq.s32.totalorder %s34, 1
      %p99 = scmp.ne.s32.totalorder %s94, %s96
      %p100 = scmp.eq.s32.totalorder %s34, 0
      %p101 = por %p99, %p100
      %p102 = scmp.ne.s32.totalorder %s94, %s96
      %p103 = scmp.eq.s32.totalorder %s39, 1
      %p104 = por %p102, %p103
      %p105 = scmp.ne.s32.totalorder %s96, %s97
      %p106 = scmp.eq.s32.totalorder %s39, 0
      %p107 = por %p105, %p106
      %p108 = scmp.ne.s32.totalorder %s96, %s97
      %p109 = scmp.eq.s32.totalorder %s40, 1
      %p110 = por %p108, %p109
      %p112 = scmp.ne.s32.totalorder %s97, %s111
      %p113 = scmp.eq.s32.totalorder %s40, 0
      %p114 = por %p112, %p113
      %s116 = sadd.s32 %s115, 1
      %p119 = scmp.eq.s32.totalorder %s34, 1
      %p120 = scmp.ne.s32.totalorder %s115, %s117
      %p121 = scmp.eq.s32.totalorder %s34, 0
      %p122 = por %p120, %p121
      %p123 = scmp.ne.s32.totalorder %s115, %s117
      %p124 = scmp.eq.s32.totalorder %s39, 1
      %p125 = por %p123, %p124
      %p126 = scmp.ne.s32.totalorder %s117, %s118
      %p127 = scmp.eq.s32.totalorder %s39, 0
      %p128 = por %p126, %p127
      %p129 = scmp.ne.s32.totalorder %s117, %s118
      %p130 = scmp.eq.s32.totalorder %s40, 1
      %p131 = por %p129, %p130
      %p133 = scmp.ne.s32.totalorder %s118, %s132
      %p134 = scmp.eq.s32.totalorder %s40, 0
      %p135 = por %p133, %p134
      %s137 = sadd.s32 %s136, 1
      %p140 = scmp.eq.s32.totalorder %s34, 1
      %p141 = scmp.ne.s32.totalorder %s136, %s138
      %p142 = scmp.eq.s32.totalorder %s34, 0
      %p143 = por %p141, %p142
      %p144 = scmp.ne.s32.totalorder %s136, %s138
      %p145 = scmp.eq.s32.totalorder %s39, 1
      %p146 = por %p144, %p145
      %p147 = scmp.ne.s32.totalorder %s138, %s139
      %p148 = scmp.eq.s32.totalorder %s39, 0
      %p149 = por %p147, %p148
      %p150 = scmp.ne.s32.totalorder %s138, %s139
      %p151 = scmp.eq.s32.totalorder %s40, 1
      %p152 = por %p150, %p151
      %p154 = scmp.ne.s32.totalorder %s139, %s153
      %p155 = scmp.eq.s32.totalorder %s40, 0
      %p156 = por %p154, %p155
      %s158 = sadd.s32 %s157, 1
      %p161 = scmp.eq.s32.totalorder %s34, 1
      %p162 = scmp.ne.s32.totalorder %s157, %s159
      %p163 = scmp.eq.s32.totalorder %s34, 0
      %p164 = por %p162, %p163
      %p165 = scmp.ne.s32.totalorder %s157, %s159
      %p166 = scmp.eq.s32.totalorder %s39, 1
      %p167 = por %p165, %p166
      %p168 = scmp.ne.s32.totalorder %s159, %s160
      %p169 = scmp.eq.s32.totalorder %s39, 0
      %p170 = por %p168, %p169
      %p171 = scmp.ne.s32.totalorder %s159, %s160
      %p172 = scmp.eq.s32.totalorder %s40, 1
      %p173 = por %p171, %p172
      %p175 = scmp.ne.s32.totalorder %s160, %s174
      %p176 = scmp.eq.s32.totalorder %s40, 0
      %p177 = por %p175, %p176
      %s179 = sadd.s32 %s178, 1
      %p182 = scmp.eq.s32.totalorder %s34, 1
      %p183 = scmp.ne.s32.totalorder %s178, %s180
      %p184 = scmp.eq.s32.totalorder %s34, 0
      %p185 = por %p183, %p184
      %p186 = scmp.ne.s32.totalorder %s178, %s180
      %p187 = scmp.eq.s32.totalorder %s39, 1
      %p188 = por %p186, %p187
      %p189 = scmp.ne.s32.totalorder %s180, %s181
      %p190 = scmp.eq.s32.totalorder %s39, 0
      %p191 = por %p189, %p190
      %p192 = scmp.ne.s32.totalorder %s180, %s181
      %p193 = scmp.eq.s32.totalorder %s40, 1
      %p194 = por %p192, %p193
      %p196 = scmp.ne.s32.totalorder %s181, %s195
      %p197 = scmp.eq.s32.totalorder %s40, 0
      %p198 = por %p196, %p197
      %s200 = sadd.s32 %s199, 1
      %p203 = scmp.eq.s32.totalorder %s34, 1
      %p204 = scmp.ne.s32.totalorder %s199, %s201
      %p205 = scmp.eq.s32.totalorder %s34, 0
      %p206 = por %p204, %p205
      %p207 = scmp.ne.s32.totalorder %s199, %s201
      %p208 = scmp.eq.s32.totalorder %s39, 1
      %p209 = por %p207, %p208
      %p210 = scmp.ne.s32.totalorder %s201, %s202
      %p211 = scmp.eq.s32.totalorder %s39, 0
      %p212 = por %p210, %p211
      %p213 = scmp.ne.s32.totalorder %s201, %s202
      %p214 = scmp.eq.s32.totalorder %s40, 1
      %p215 = por %p213, %p214
      %p217 = scmp.ne.s32.totalorder %s202, %s216
      %p218 = scmp.eq.s32.totalorder %s40, 0
      %p219 = por %p217, %p218
      %s221 = sadd.s32 %s220, 1
      %p224 = scmp.eq.s32.totalorder %s34, 1
      %p225 = scmp.ne.s32.totalorder %s220, %s222
      %p226 = scmp.eq.s32.totalorder %s34, 0
      %p227 = por %p225, %p226
      %p228 = scmp.ne.s32.totalorder %s220, %s222
      %p229 = scmp.eq.s32.totalorder %s39, 1
      %p230 = por %p228, %p229
      %p231 = scmp.ne.s32.totalorder %s222, %s223
      %p232 = scmp.eq.s32.totalorder %s39, 0
      %p233 = por %p231, %p232
      %p234 = scmp.ne.s32.totalorder %s222, %s223
      %p235 = scmp.eq.s32.totalorder %s40, 1
      %p236 = por %p234, %p235
      %p238 = scmp.ne.s32.totalorder %s223, %s237
      %p239 = scmp.eq.s32.totalorder %s40, 0
      %p240 = por %p238, %p239
      %s242 = sadd.s32 %s241, 1
      %p245 = scmp.eq.s32.totalorder %s34, 1
      %p246 = scmp.ne.s32.totalorder %s241, %s243
      %p247 = scmp.eq.s32.totalorder %s34, 0
      %p248 = por %p246, %p247
      %p249 = scmp.ne.s32.totalorder %s241, %s243
      %p250 = scmp.eq.s32.totalorder %s39, 1
      %p251 = por %p249, %p250
      %p252 = scmp.ne.s32.totalorder %s243, %s244
      %p253 = scmp.eq.s32.totalorder %s39, 0
      %p254 = por %p252, %p253
      %p255 = scmp.ne.s32.totalorder %s243, %s244
      %p256 = scmp.eq.s32.totalorder %s40, 1
      %p257 = por %p255, %p256
      %p259 = scmp.ne.s32.totalorder %s244, %s258
      %p260 = scmp.eq.s32.totalorder %s40, 0
      %p261 = por %p259, %p260
      %s263 = sadd.s32 %s262, 1
      %p266 = scmp.eq.s32.totalorder %s34, 1
      %p267 = scmp.ne.s32.totalorder %s262, %s264
      %p268 = scmp.eq.s32.totalorder %s34, 0
      %p269 = por %p267, %p268
      %p270 = scmp.ne.s32.totalorder %s262, %s264
      %p271 = scmp.eq.s32.totalorder %s39, 1
      %p272 = por %p270, %p271
      %p273 = scmp.ne.s32.totalorder %s264, %s265
      %p274 = scmp.eq.s32.totalorder %s39, 0
      %p275 = por %p273, %p274
      %p276 = scmp.ne.s32.totalorder %s264, %s265
      %p277 = scmp.eq.s32.totalorder %s40, 1
      %p278 = por %p276, %p277
      %p280 = scmp.ne.s32.totalorder %s265, %s279
      %p281 = scmp.eq.s32.totalorder %s40, 0
      %p282 = por %p280, %p281
      %s284 = sadd.s32 %s283, 1
      %p287 = scmp.eq.s32.totalorder %s34, 1
      %p288 = scmp.ne.s32.totalorder %s283, %s285
      %p289 = scmp.eq.s32.totalorder %s34, 0
      %p290 = por %p288, %p289
      %p291 = scmp.ne.s32.totalorder %s283, %s285
      %p292 = scmp.eq.s32.totalorder %s39, 1
      %p293 = por %p291, %p292
      %p294 = scmp.ne.s32.totalorder %s285, %s286
      %p295 = scmp.eq.s32.totalorder %s39, 0
      %p296 = por %p294, %p295
      %p297 = scmp.ne.s32.totalorder %s285, %s286
      %p298 = scmp.eq.s32.totalorder %s40, 1
      %p299 = por %p297, %p298
      %p301 = scmp.ne.s32.totalorder %s286, %s300
      %p302 = scmp.eq.s32.totalorder %s40, 0
      %p303 = por %p301, %p302
      %s305 = sadd.s32 %s304, 1
      %p308 = scmp.eq.s32.totalorder %s34, 1
      %p309 = scmp.ne.s32.totalorder %s304, %s306
      %p310 = scmp.eq.s32.totalorder %s34, 0
      %p311 = por %p309, %p310
      %p312 = scmp.ne.s32.totalorder %s304, %s306
      %p313 = scmp.eq.s32.totalorder %s39, 1
      %p314 = por %p312, %p313
      %p315 = scmp.ne.s32.totalorder %s306, %s307
      %p316 = scmp.eq.s32.totalorder %s39, 0
      %p317 = por %p315, %p316
      %p318 = scmp.ne.s32.totalorder %s306, %s307
      %p319 = scmp.eq.s32.totalorder %s40, 1
      %p320 = por %p318, %p319
      %p322 = scmp.ne.s32.totalorder %s307, %s321
      %p323 = scmp.eq.s32.totalorder %s40, 0
      %p324 = por %p322, %p323
      %s326 = sadd.s32 %s325, 1
      %p329 = scmp.eq.s32.totalorder %s34, 1
      %p330 = scmp.ne.s32.totalorder %s325, %s327
      %p331 = scmp.eq.s32.totalorder %s34, 0
      %p332 = por %p330, %p331
      %p333 = scmp.ne.s32.totalorder %s325, %s327
      %p334 = scmp.eq.s32.totalorder %s39, 1
      %p335 = por %p333, %p334
      %p336 = scmp.ne.s32.totalorder %s327, %s328
      %p337 = scmp.eq.s32.totalorder %s39, 0
      %p338 = por %p336, %p337
      %p339 = scmp.ne.s32.totalorder %s327, %s328
      %p340 = scmp.eq.s32.totalorder %s40, 1
      %p341 = por %p339, %p340
      %p343 = scmp.ne.s32.totalorder %s328, %s342
      %p344 = scmp.eq.s32.totalorder %s40, 0
      %p345 = por %p343, %p344
      %s347 = sadd.s32 %s346, 1
      %p350 = scmp.eq.s32.totalorder %s34, 1
      %p351 = scmp.ne.s32.totalorder %s346, %s348
      %p352 = scmp.eq.s32.totalorder %s34, 0
      %p353 = por %p351, %p352
      %p354 = scmp.ne.s32.totalorder %s346, %s348
      %p355 = scmp.eq.s32.totalorder %s39, 1
      %p356 = por %p354, %p355
      %p357 = scmp.ne.s32.totalorder %s348, %s349
      %p358 = scmp.eq.s32.totalorder %s39, 0
      %p359 = por %p357, %p358
      %p360 = scmp.ne.s32.totalorder %s348, %s349
      %p361 = scmp.eq.s32.totalorder %s40, 1
      %p362 = por %p360, %p361
      %p364 = scmp.ne.s32.totalorder %s349, %s363
      %p365 = scmp.eq.s32.totalorder %s40, 0
      %p366 = por %p364, %p365
      %s367 = ssub.s32 %s34, %s41
      %p368 = scmp.eq.s32.totalorder %s367, 0
      %s370 = sadd.s32 %s369, 1
      %s371 = scalar_select %p368, %s369, %s370
      %p374 = pneg %p368
      %p375 = scmp.eq.s32.totalorder %s34, 1
      %p376 = por %p374, %p375
      %p377 = scmp.ne.s32.totalorder %s369, %s372
      %p378 = scmp.eq.s32.totalorder %s34, 0
      %p379 = por %p377, %p378
      %p380 = scmp.ne.s32.totalorder %s369, %s372
      %p381 = scmp.eq.s32.totalorder %s39, 1
      %p382 = por %p380, %p381
      %p383 = scmp.ne.s32.totalorder %s372, %s373
      %p384 = scmp.eq.s32.totalorder %s39, 0
      %p385 = por %p383, %p384
      %p386 = scmp.ne.s32.totalorder %s372, %s373
      %p387 = scmp.eq.s32.totalorder %s40, 1
      %p388 = por %p386, %p387
      %p390 = scmp.ne.s32.totalorder %s373, %s389
      %p391 = scmp.eq.s32.totalorder %s40, 0
      %p392 = por %p390, %p391
      %s393 = ssub.s32 %s34, %s41
      %p394 = scmp.eq.s32.totalorder %s393, 0
      %s396 = sadd.s32 %s395, 1
      %s397 = scalar_select %p394, %s395, %s396
      %p400 = pneg %p394
      %p401 = scmp.eq.s32.totalorder %s34, 1
      %p402 = por %p400, %p401
      %p403 = scmp.ne.s32.totalorder %s395, %s398
      %p404 = scmp.eq.s32.totalorder %s34, 0
      %p405 = por %p403, %p404
      %p406 = scmp.ne.s32.totalorder %s395, %s398
      %p407 = scmp.eq.s32.totalorder %s39, 1
      %p408 = por %p406, %p407
      %p409 = scmp.ne.s32.totalorder %s398, %s399
      %p410 = scmp.eq.s32.totalorder %s39, 0
      %p411 = por %p409, %p410
      %p412 = scmp.ne.s32.totalorder %s398, %s399
      %p413 = scmp.eq.s32.totalorder %s40, 1
      %p414 = por %p412, %p413
      %p416 = scmp.ne.s32.totalorder %s399, %s415
      %p417 = scmp.eq.s32.totalorder %s40, 0
      %p418 = por %p416, %p417
      %p419 = scmp.le.s32.totalorder 1, %s34
      %p420 = scmp.lt.s32.totalorder %s34, 3
      %p421 = pnand %p419, %p420
      %p422 = pneg %p421
      // Predicated region
      $region9: #{tpu_custom_call.1} parent=5 // pred_check
        _
      $region10: #{tpu_custom_call.1} parent=5 // pred_check_branch
        %424 = sbr.rel (%p421) target = $region12
      $region11: #{tpu_custom_call.1} parent=5 // pred_region
        %s425 = ssub.s32 %s34, 1
        // Predicated region
        $region13: #{tpu_custom_call.1} parent=11 // pred_check
          %p426 = pneg %p107
        $region14: #{tpu_custom_call.1} parent=11 // pred_check_branch
          %428 = sbr.rel (%p426) target = $region16
        $region15: #{tpu_custom_call.1} parent=11 // pred_region
          _
        $region16: #{tpu_custom_call.1} parent=11 // pred_fallthru
          _
        // Predicated region
        $region17: #{tpu_custom_call.1} parent=11 // pred_check
          %p429 = pneg %p128
        $region18: #{tpu_custom_call.1} parent=11 // pred_check_branch
          %431 = sbr.rel (%p429) target = $region20
        $region19: #{tpu_custom_call.1} parent=11 // pred_region
          _
        $region20: #{tpu_custom_call.1} parent=11 // pred_fallthru
          _
        // Predicated region
        $region21: #{tpu_custom_call.1} parent=11 // pred_check
          %p432 = pneg %p149
        $region22: #{tpu_custom_call.1} parent=11 // pred_check_branch
          %434 = sbr.rel (%p432) target = $region24
        $region23: #{tpu_custom_call.1} parent=11 // pred_region
          _
        $region24: #{tpu_custom_call.1} parent=11 // pred_fallthru
          _
        // Predicated region
        $region25: #{tpu_custom_call.1} parent=11 // pred_check
          %p435 = pneg %p170
        $region26: #{tpu_custom_call.1} parent=11 // pred_check_branch
          %437 = sbr.rel (%p435) target = $region28
        $region27: #{tpu_custom_call.1} parent=11 // pred_region
          %439 = vsyncadd [#allocation6], 0
          %s441 = sshll.u32 %s5, 4
          %s442 = int_to_ptr.hbm [resolvable:$true] %s441
          %s443 = sshll.u32 [#allocation5], 4
          %s444 = int_to_ptr.vmem [resolvable:$true] %s443
          %446 = dma.hbm_to_vmem [thread:$0]  %s442, 16, %s444, [#allocation6]
        $region28: #{tpu_custom_call.1} parent=11 // pred_fallthru
          _
        // Predicated region
        $region29: #{tpu_custom_call.1} parent=11 // pred_check
          %p447 = pneg %p191
        $region30: #{tpu_custom_call.1} parent=11 // pred_check_branch
          %449 = sbr.rel (%p447) target = $region32
        $region31: #{tpu_custom_call.1} parent=11 // pred_region
          _
        $region32: #{tpu_custom_call.1} parent=11 // pred_fallthru
          _
        // Predicated region
        $region33: #{tpu_custom_call.1} parent=11 // pred_check
          %p450 = pneg %p212
        $region34: #{tpu_custom_call.1} parent=11 // pred_check_branch
          %452 = sbr.rel (%p450) target = $region36
        $region35: #{tpu_custom_call.1} parent=11 // pred_region
          _
        $region36: #{tpu_custom_call.1} parent=11 // pred_fallthru
          _
        // Predicated region
        $region37: #{tpu_custom_call.1} parent=11 // pred_check
          %p453 = pneg %p233
        $region38: #{tpu_custom_call.1} parent=11 // pred_check_branch
          %455 = sbr.rel (%p453) target = $region40
        $region39: #{tpu_custom_call.1} parent=11 // pred_region
          %457 = vsyncadd [#allocation6], 0
          %s459 = sshll.u32 %s8, 4
          %s460 = int_to_ptr.hbm [resolvable:$true] %s459
          %s461 = sshll.u32 [#allocation7], 4
          %s462 = int_to_ptr.vmem [resolvable:$true] %s461
          %464 = dma.hbm_to_vmem [thread:$0]  %s460, 16, %s462, [#allocation6]
        $region40: #{tpu_custom_call.1} parent=11 // pred_fallthru
          _
        // Predicated region
        $region41: #{tpu_custom_call.1} parent=11 // pred_check
          %p465 = pneg %p254
        $region42: #{tpu_custom_call.1} parent=11 // pred_check_branch
          %467 = sbr.rel (%p465) target = $region44
        $region43: #{tpu_custom_call.1} parent=11 // pred_region
          _
        $region44: #{tpu_custom_call.1} parent=11 // pred_fallthru
          _
        // Predicated region
        $region45: #{tpu_custom_call.1} parent=11 // pred_check
          %p468 = pneg %p275
        $region46: #{tpu_custom_call.1} parent=11 // pred_check_branch
          %470 = sbr.rel (%p468) target = $region48
        $region47: #{tpu_custom_call.1} parent=11 // pred_region
          %472 = vsyncadd [#allocation9], 0
          %s474 = sshll.u32 %s10, 4
          %s475 = int_to_ptr.hbm [resolvable:$true] %s474
          %s476 = sshll.u32 [#allocation8], 4
          %s477 = int_to_ptr.vmem [resolvable:$true] %s476
          %479 = dma.hbm_to_vmem [thread:$0]  %s475, 16, %s477, [#allocation9]
        $region48: #{tpu_custom_call.1} parent=11 // pred_fallthru
          _
        // Predicated region
        $region49: #{tpu_custom_call.1} parent=11 // pred_check
          %p480 = pneg %p296
        $region50: #{tpu_custom_call.1} parent=11 // pred_check_branch
          %482 = sbr.rel (%p480) target = $region52
        $region51: #{tpu_custom_call.1} parent=11 // pred_region
          _
        $region52: #{tpu_custom_call.1} parent=11 // pred_fallthru
          _
        // Predicated region
        $region53: #{tpu_custom_call.1} parent=11 // pred_check
          %p483 = pneg %p317
        $region54: #{tpu_custom_call.1} parent=11 // pred_check_branch
          %485 = sbr.rel (%p483) target = $region56
        $region55: #{tpu_custom_call.1} parent=11 // pred_region
          _
        $region56: #{tpu_custom_call.1} parent=11 // pred_fallthru
          _
        // Predicated region
        $region57: #{tpu_custom_call.1} parent=11 // pred_check
          %p486 = pneg %p338
        $region58: #{tpu_custom_call.1} parent=11 // pred_check_branch
          %488 = sbr.rel (%p486) target = $region60
        $region59: #{tpu_custom_call.1} parent=11 // pred_region
          _
        $region60: #{tpu_custom_call.1} parent=11 // pred_fallthru
          _
        // Predicated region
        $region61: #{tpu_custom_call.1} parent=11 // pred_check
          %p489 = pneg %p359
        $region62: #{tpu_custom_call.1} parent=11 // pred_check_branch
          %491 = sbr.rel (%p489) target = $region64
        $region63: #{tpu_custom_call.1} parent=11 // pred_region
          _
        $region64: #{tpu_custom_call.1} parent=11 // pred_fallthru
          _
      $region12: #{tpu_custom_call.1} parent=5 // pred_fallthru
        _
      %p492 = scmp.lt.s32.totalorder %s34, 2
      // Predicated region
      $region65: #{tpu_custom_call.1} parent=5 // pred_check
        %p493 = pneg %p492
      $region66: #{tpu_custom_call.1} parent=5 // pred_check_branch
        %495 = sbr.rel (%p493) target = $region68
      $region67: #{tpu_custom_call.1} parent=5 // pred_region
        // Predicated region
        $region69: #{tpu_custom_call.1} parent=67 // pred_check
          %p496 = pneg %p54
        $region70: #{tpu_custom_call.1} parent=67 // pred_check_branch
          %498 = sbr.rel (%p496) target = $region72
        $region71: #{tpu_custom_call.1} parent=67 // pred_region
          %p499 = scmp.lt.s32.totalorder %s34, 1
          %s500 = scalar_select %p499, %s34, 1
          %s501 = smul.addr %s500, 8
          %s502 = scalar_lea.vmem %s0, %s501
        $region72: #{tpu_custom_call.1} parent=67 // pred_fallthru
          _
        // Predicated region
        $region73: #{tpu_custom_call.1} parent=67 // pred_check
          %p503 = pneg %p80
        $region74: #{tpu_custom_call.1} parent=67 // pred_check_branch
          %505 = sbr.rel (%p503) target = $region76
        $region75: #{tpu_custom_call.1} parent=67 // pred_region
          %s506 = sand.u32 %s70, 1
          %s507 = scalar_lea.sflag [#allocation3], %s506
          %s508 = sand.u32 %s70, 1
          %s509 = smul.addr %s508, 8
          %s510 = scalar_lea.vmem [#allocation2], %s509
          %512 = vsyncadd %s507, 0
          %s513 = smul.addr %s34, 8
          %s514 = scalar_lea.hbm %s1, %s513
          %s516 = sshll.u32 %s514, 4
          %s517 = int_to_ptr.hbm [resolvable:$true] %s516
          %s518 = sshll.u32 %s510, 4
          %s519 = int_to_ptr.vmem [resolvable:$true] %s518
          %521 = dma.hbm_to_vmem [thread:$0]  %s517, 128, %s519, %s507
        $region76: #{tpu_custom_call.1} parent=67 // pred_fallthru
          _
      $region68: #{tpu_custom_call.1} parent=5 // pred_fallthru
        _
      %p522 = scmp.le.s32.totalorder 1, %s34
      %p523 = scmp.lt.s32.totalorder %s34, 3
      %p524 = pnand %p522, %p523
      %p525 = pneg %p524
      // Predicated region
      $region77: #{tpu_custom_call.1} parent=5 // pred_check
        _
      $region78: #{tpu_custom_call.1} parent=5 // pred_check_branch
        %527 = sbr.rel (%p524) target = $region80
      $region79: #{tpu_custom_call.1} parent=5 // pred_region
        %s528 = ssub.s32 %s34, 1
        %s529 = sand.u32 %s73, 1
        %s530 = scalar_lea.sflag [#allocation3], %s529
        %s531 = sand.u32 %s73, 1
        %s532 = smul.addr %s531, 8
        %s533 = scalar_lea.vmem [#allocation2], %s532
        // Predicated region
        $region81: #{tpu_custom_call.1} parent=79 // pred_check
          %p534 = pneg %p86
        $region82: #{tpu_custom_call.1} parent=79 // pred_check_branch
          %536 = sbr.rel (%p534) target = $region84
        $region83: #{tpu_custom_call.1} parent=79 // pred_region
          %538 = dma.done %s530, 128
        $region84: #{tpu_custom_call.1} parent=79 // pred_fallthru
          _
        // Predicated region
        $region85: #{tpu_custom_call.1} parent=79 // pred_check
          %p539 = pneg %p170
        $region86: #{tpu_custom_call.1} parent=79 // pred_check_branch
          %541 = sbr.rel (%p539) target = $region88
        $region87: #{tpu_custom_call.1} parent=79 // pred_region
          %543 = dma.done [#allocation6], 16
        $region88: #{tpu_custom_call.1} parent=79 // pred_fallthru
          _
        // Predicated region
        $region89: #{tpu_custom_call.1} parent=79 // pred_check
          %p544 = pneg %p233
        $region90: #{tpu_custom_call.1} parent=79 // pred_check_branch
          %546 = sbr.rel (%p544) target = $region92
        $region91: #{tpu_custom_call.1} parent=79 // pred_region
          %548 = dma.done [#allocation6], 16
        $region92: #{tpu_custom_call.1} parent=79 // pred_fallthru
          _
        // Predicated region
        $region93: #{tpu_custom_call.1} parent=79 // pred_check
          %p549 = pneg %p275
        $region94: #{tpu_custom_call.1} parent=79 // pred_check_branch
          %551 = sbr.rel (%p549) target = $region96
        $region95: #{tpu_custom_call.1} parent=79 // pred_region
          %553 = dma.done [#allocation9], 16
        $region96: #{tpu_custom_call.1} parent=79 // pred_fallthru
          _
        %p554 = scmp.lt.s32.totalorder %s39, 1
        %s555 = scalar_select %p554, %s39, 1
        %s556 = smul.addr %s555, 8
        %s557 = scalar_lea.vmem %s0, %s556
        %p558 = pneg %p60
        %p559 = pneg %p57
        %s560 = sand.u32 %s73, 1
        %s561 = scalar_lea.sflag [#allocation3], %s560
        %s562 = sand.u32 %s73, 1
        %s563 = smul.addr %s562, 8
        %s564 = scalar_lea.vmem [#allocation2], %s563
        %p565 = pneg %p86
        %p566 = pneg %p83
        %p567 = pneg %p107
        %p568 = pneg %p104
        %p569 = pneg %p128
        %p570 = pneg %p125
        %p571 = pneg %p149
        %p572 = pneg %p146
        %p573 = pneg %p170
        %p574 = pneg %p167
        %p575 = pneg %p191
        %p576 = pneg %p188
        %p577 = pneg %p212
        %p578 = pneg %p209
        %p579 = pneg %p233
        %p580 = pneg %p230
        %p581 = pneg %p254
        %p582 = pneg %p251
        %p583 = pneg %p275
        %p584 = pneg %p272
        %p585 = pneg %p296
        %p586 = pneg %p293
        %p587 = pneg %p317
        %p588 = pneg %p314
        %p589 = pneg %p338
        %p590 = pneg %p335
        %p591 = pneg %p359
        %p592 = pneg %p356
        %p593 = pneg %p385
        %p594 = pneg %p382
        %s595 = sand.u32 %s372, 1
        %s596 = scalar_lea.sflag [#allocation4], %s595
        %s597 = sand.u32 %s372, 1
        %s598 = smul.addr %s597, 8
        %s599 = scalar_lea.vmem [#allocation10], %s598
        %p600 = pneg %p411
        %p601 = pneg %p408
        %s602 = sand.u32 %s398, 1
        %s603 = scalar_lea.sflag [#allocation12], %s602
        %s604 = sand.u32 %s398, 1
        %s605 = smul.addr %s604, 8
        %s606 = scalar_lea.vmem [#allocation11], %s605
        %p607 = scmp.lt.s32.totalorder %s39, 1
        %s608 = scalar_select %p607, %s39, 1
        %s609 = smul.addr %s608, 8
        %s610 = scalar_lea.vmem %s0, %s609
        %v612 = vld [vmem:[%s610] sm:$0xff]
        %v613 = vpack.c.bf16 %v612, %v612
        %v614 = vld [vmem:[%s533] sm:$0xff]
        %v615 = vpack.c.bf16 %v614, %v614
        %v616 = vld [vmem:[%s2] sm:$0xf]
        %v617 = vld [vmem:[%s2 + $0x4] sm:$0xf]
        %v618 = vld [vmem:[%s2 + $0x8] sm:$0xf]
        %v619 = vld [vmem:[%s2 + $0xc] sm:$0xf]
        %v620 = vld [vmem:[%s2 + $0x10] sm:$0xf]
        %v621 = vld [vmem:[%s2 + $0x14] sm:$0xf]
        %v622 = vld [vmem:[%s2 + $0x18] sm:$0xf]
        %v623 = vld [vmem:[%s2 + $0x1c] sm:$0xf]
        %v624 = vld [vmem:[%s3] sm:$0x1]
        %v626 = vperm.slane %v624, 0
        %v636 = vunpack.c.l.b16 %v616
        %v637 = vunpack.c.l.b16 %v617
        %v638 = vunpack.c.l.b16 %v618
        %v639 = vunpack.c.l.b16 %v619
        %v640 = vunpack.c.l.b16 %v620
        %v641 = vunpack.c.l.b16 %v621
        %v642 = vunpack.c.l.b16 %v622
        %v643 = vunpack.c.l.b16 %v623
        %v644 = vpack.c.b16 %v637, %v636
        %v645 = vpack.c.b16 %v639, %v638
        %v646 = vpack.c.b16 %v641, %v640
        %v647 = vpack.c.b16 %v643, %v642
        %vm652 = vcmask 523264
        %v654 = vsel %vm652, %v613, 0
        %656 = vmatpush.bf16.msra.mxu0 0
        %657 = vmatpush.bf16.msra.mxu0 0
        %658 = vmatpush.bf16.msra.mxu0 0
        %659 = vmatpush.bf16.msra.mxu0 0
        %660 = vmatpush.bf16.msra.mxu0 %v647
        %661 = vmatpush.bf16.msra.mxu0 %v646
        %662 = vmatpush.bf16.msra.mxu0 %v645
        %663 = vmatpush.bf16.msra.mxu0 %v644
        %664 = vmatmul.bf16.gmra.mxu0 %v654
        %v665 = vpop.f32.mrf.mxu0
        %v666 = vadd.f32 %v626, %v665
        %v667 = vpop.f32.mrf.mxu0
        %668 = vdwg.mxu0
        %v669 = vld [vmem:[%s4] sm:$0xf]
        %v670 = vld [vmem:[%s4 + $0x4] sm:$0xf]
        %v671 = vld [vmem:[%s4 + $0x8] sm:$0xf]
        %v672 = vld [vmem:[%s4 + $0xc] sm:$0xf]
        %v673 = vld [vmem:[%s4 + $0x10] sm:$0xf]
        %v674 = vld [vmem:[%s4 + $0x14] sm:$0xf]
        %v675 = vld [vmem:[%s4 + $0x18] sm:$0xf]
        %v676 = vld [vmem:[%s4 + $0x1c] sm:$0xf]
        %v677 = vld [vmem:[%s4 + $0x20] sm:$0xf]
        %v678 = vld [vmem:[%s4 + $0x24] sm:$0xf]
        %v679 = vld [vmem:[%s4 + $0x28] sm:$0xf]
        %v680 = vld [vmem:[%s4 + $0x2c] sm:$0xf]
        %v681 = vld [vmem:[%s4 + $0x30] sm:$0xf]
        %v682 = vld [vmem:[%s4 + $0x34] sm:$0xf]
        %v683 = vld [vmem:[%s4 + $0x38] sm:$0xf]
        %v684 = vld [vmem:[%s4 + $0x3c] sm:$0xf]
        %v685 = vld [vmem:[#allocation5] sm:$0x1]
        %v687 = vperm.slane %v685, 0
        %v705 = vunpack.c.l.b16 %v669
        %v706 = vunpack.c.l.b16 %v670
        %v707 = vunpack.c.l.b16 %v671
        %v708 = vunpack.c.l.b16 %v672
        %v709 = vunpack.c.l.b16 %v673
        %v710 = vunpack.c.l.b16 %v674
        %v711 = vunpack.c.l.b16 %v675
        %v712 = vunpack.c.l.b16 %v676
        %v713 = vunpack.c.l.b16 %v677
        %v714 = vunpack.c.l.b16 %v678
        %v715 = vunpack.c.l.b16 %v679
        %v716 = vunpack.c.l.b16 %v680
        %v717 = vunpack.c.l.b16 %v681
        %v718 = vunpack.c.l.b16 %v682
        %v719 = vunpack.c.l.b16 %v683
        %v720 = vunpack.c.l.b16 %v684
        %v721 = vpack.c.b16 %v706, %v705
        %v722 = vpack.c.b16 %v708, %v707
        %v723 = vpack.c.b16 %v710, %v709
        %v724 = vpack.c.b16 %v712, %v711
        %v725 = vpack.c.b16 %v714, %v713
        %v726 = vpack.c.b16 %v716, %v715
        %v727 = vpack.c.b16 %v718, %v717
        %v728 = vpack.c.b16 %v720, %v719
        %737 = vmatpush.bf16.msra.mxu0 %v728
        %738 = vmatpush.bf16.msra.mxu0 %v727
        %739 = vmatpush.bf16.msra.mxu0 %v726
        %740 = vmatpush.bf16.msra.mxu0 %v725
        %741 = vmatpush.bf16.msra.mxu0 %v724
        %742 = vmatpush.bf16.msra.mxu0 %v723
        %743 = vmatpush.bf16.msra.mxu0 %v722
        %744 = vmatpush.bf16.msra.mxu0 %v721
        %745 = vmatmul.bf16.gmra.mxu0 %v615
        %v746 = vpop.f32.mrf.mxu0
        %v747 = vadd.f32 %v687, %v746
        %v748 = vpop.f32.mrf.mxu0
        %749 = vdwg.mxu0
        %v750 = vpack.c.bf16 %v666, %v666
        %v751 = vld [vmem:[%s6] sm:$0xf]
        %v752 = vld [vmem:[%s6 + $0x4] sm:$0xf]
        %v753 = vld [vmem:[%s6 + $0x8] sm:$0xf]
        %v754 = vld [vmem:[%s6 + $0xc] sm:$0xf]
        %v755 = vld [vmem:[%s6 + $0x10] sm:$0xf]
        %v756 = vld [vmem:[%s6 + $0x14] sm:$0xf]
        %v757 = vld [vmem:[%s6 + $0x18] sm:$0xf]
        %v758 = vld [vmem:[%s6 + $0x1c] sm:$0xf]
        %v759 = vpack.c.bf16 %v747, %v747
        %v760 = vld [vmem:[%s7] sm:$0xf]
        %v761 = vld [vmem:[%s7 + $0x4] sm:$0xf]
        %v762 = vld [vmem:[%s7 + $0x8] sm:$0xf]
        %v763 = vld [vmem:[%s7 + $0xc] sm:$0xf]
        %v764 = vld [vmem:[%s7 + $0x10] sm:$0xf]
        %v765 = vld [vmem:[%s7 + $0x14] sm:$0xf]
        %v766 = vld [vmem:[%s7 + $0x18] sm:$0xf]
        %v767 = vld [vmem:[%s7 + $0x1c] sm:$0xf]
        %v776 = vunpack.c.l.b16 %v760
        %v777 = vunpack.c.l.b16 %v761
        %v778 = vunpack.c.l.b16 %v762
        %v779 = vunpack.c.l.b16 %v763
        %v780 = vunpack.c.l.b16 %v764
        %v781 = vunpack.c.l.b16 %v765
        %v782 = vunpack.c.l.b16 %v766
        %v783 = vunpack.c.l.b16 %v767
        %v784 = vpack.c.b16 %v777, %v776
        %v785 = vpack.c.b16 %v779, %v778
        %v786 = vpack.c.b16 %v781, %v780
        %v787 = vpack.c.b16 %v783, %v782
        %v793 = vsel %vm652, %v759, 0
        %795 = vmatpush.bf16.msra.mxu0 0
        %796 = vmatpush.bf16.msra.mxu0 0
        %797 = vmatpush.bf16.msra.mxu0 0
        %798 = vmatpush.bf16.msra.mxu0 0
        %799 = vmatpush.bf16.msra.mxu0 %v787
        %800 = vmatpush.bf16.msra.mxu0 %v786
        %801 = vmatpush.bf16.msra.mxu0 %v785
        %802 = vmatpush.bf16.msra.mxu0 %v784
        %803 = vmatmul.bf16.gmra.mxu0 %v793
        %v804 = vpop.f32.mrf.mxu0
        %v805 = vadd.f32 0.0, %v804
        %v806 = vpop.f32.mrf.mxu0
        %807 = vdwg.mxu0
        %v816 = vunpack.c.l.b16 %v751
        %v817 = vunpack.c.l.b16 %v752
        %v818 = vunpack.c.l.b16 %v753
        %v819 = vunpack.c.l.b16 %v754
        %v820 = vunpack.c.l.b16 %v755
        %v821 = vunpack.c.l.b16 %v756
        %v822 = vunpack.c.l.b16 %v757
        %v823 = vunpack.c.l.b16 %v758
        %v824 = vpack.c.b16 %v817, %v816
        %v825 = vpack.c.b16 %v819, %v818
        %v826 = vpack.c.b16 %v821, %v820
        %v827 = vpack.c.b16 %v823, %v822
        %v833 = vsel %vm652, %v750, 0
        %835 = vmatpush.bf16.msra.mxu0 0
        %836 = vmatpush.bf16.msra.mxu0 0
        %837 = vmatpush.bf16.msra.mxu0 0
        %838 = vmatpush.bf16.msra.mxu0 0
        %839 = vmatpush.bf16.msra.mxu0 %v827
        %840 = vmatpush.bf16.msra.mxu0 %v826
        %841 = vmatpush.bf16.msra.mxu0 %v825
        %842 = vmatpush.bf16.msra.mxu0 %v824
        %843 = vmatmul.bf16.gmra.mxu0 %v833
        %v844 = vpop.f32.mrf.mxu0
        %v845 = vadd.f32 %v805, %v844
        %v846 = vpop.f32.mrf.mxu0
        %847 = vdwg.mxu0
        %v848 = vld [vmem:[#allocation7] sm:$0x1]
        %v850 = vperm.slane %v848, 0
        %v852 = vadd.f32 %v845, %v850
        %v853 = vmax.f32 %v852, 0.0
        %v854 = vpack.c.bf16 %v853, %v853
        %v855 = vld [vmem:[%s9] sm:$0xf]
        %v856 = vld [vmem:[%s9 + $0x4] sm:$0xf]
        %v857 = vld [vmem:[%s9 + $0x8] sm:$0xf]
        %v858 = vld [vmem:[%s9 + $0xc] sm:$0xf]
        %v859 = vld [vmem:[%s9 + $0x10] sm:$0xf]
        %v860 = vld [vmem:[%s9 + $0x14] sm:$0xf]
        %v861 = vld [vmem:[%s9 + $0x18] sm:$0xf]
        %v862 = vld [vmem:[%s9 + $0x1c] sm:$0xf]
        %v863 = vld [vmem:[#allocation8] sm:$0x1]
        %v865 = vperm.slane %v863, 0
        %v875 = vunpack.c.l.b16 %v855
        %v876 = vunpack.c.l.b16 %v856
        %v877 = vunpack.c.l.b16 %v857
        %v878 = vunpack.c.l.b16 %v858
        %v879 = vunpack.c.l.b16 %v859
        %v880 = vunpack.c.l.b16 %v860
        %v881 = vunpack.c.l.b16 %v861
        %v882 = vunpack.c.l.b16 %v862
        %v883 = vpack.c.b16 %v876, %v875
        %v884 = vpack.c.b16 %v878, %v877
        %v885 = vpack.c.b16 %v880, %v879
        %v886 = vpack.c.b16 %v882, %v881
        %v892 = vsel %vm652, %v854, 0
        %894 = vmatpush.bf16.msra.mxu0 0
        %895 = vmatpush.bf16.msra.mxu0 0
        %896 = vmatpush.bf16.msra.mxu0 0
        %897 = vmatpush.bf16.msra.mxu0 0
        %898 = vmatpush.bf16.msra.mxu0 %v886
        %899 = vmatpush.bf16.msra.mxu0 %v885
        %900 = vmatpush.bf16.msra.mxu0 %v884
        %901 = vmatpush.bf16.msra.mxu0 %v883
        %902 = vmatmul.bf16.gmra.mxu0 %v892
        %v903 = vpop.f32.mrf.mxu0
        %v904 = vadd.f32 %v865, %v903
        %v905 = vpop.f32.mrf.mxu0
        %906 = vdwg.mxu0
        %v907 = vmax.f32 %v904, 0.0
        %vm908 = vcmask 261120
        %909 = vst.msk [vmem:[%s606] sm:$0xff] %vm908, %v907
        %v910 = vpack.c.bf16 %v907, %v907
        %v911 = vld [vmem:[%s11] sm:$0xff]
        %v912 = vld [vmem:[%s11 + $0x8] sm:$0xff]
        %v913 = vld [vmem:[%s11 + $0x10] sm:$0xff]
        %v914 = vld [vmem:[%s11 + $0x18] sm:$0xff]
        %v915 = vld [vmem:[%s12] sm:$0x3]
        %v917 = vperm.slane %v915, 0
        %v918 = vperm.slane %v915, 1
        %v925 = vunpack.c.l.b16 %v911
        %v926 = vunpack.c.h.b16 %v911
        %v927 = vunpack.c.l.b16 %v912
        %v928 = vunpack.c.h.b16 %v912
        %v929 = vunpack.c.l.b16 %v913
        %v930 = vunpack.c.h.b16 %v913
        %v931 = vunpack.c.l.b16 %v914
        %v932 = vunpack.c.h.b16 %v914
        %v933 = vpack.c.b16 %v927, %v925
        %v934 = vpack.c.b16 %v928, %v926
        %v935 = vpack.c.b16 %v931, %v929
        %v936 = vpack.c.b16 %v932, %v930
        %v942 = vsel %vm908, %v910, 0
        %944 = vmatpush.bf16.msra.mxu0 0
        %945 = vmatpush.bf16.msra.mxu0 0
        %946 = vmatpush.bf16.msra.mxu0 0
        %947 = vmatpush.bf16.msra.mxu0 0
        %948 = vmatpush.bf16.msra.mxu0 0
        %949 = vmatpush.bf16.msra.mxu0 0
        %950 = vmatpush.bf16.msra.mxu0 %v935
        %951 = vmatpush.bf16.msra.mxu0 %v933
        %952 = vmatmul.bf16.gmra.mxu0 %v942
        %v953 = vpop.f32.mrf.mxu0
        %v954 = vadd.f32 %v917, %v953
        %v955 = vpop.f32.mrf.mxu0
        %956 = vdwg.mxu0
        %957 = vmatpush.bf16.msra.mxu0 0
        %958 = vmatpush.bf16.msra.mxu0 0
        %959 = vmatpush.bf16.msra.mxu0 0
        %960 = vmatpush.bf16.msra.mxu0 0
        %961 = vmatpush.bf16.msra.mxu0 0
        %962 = vmatpush.bf16.msra.mxu0 0
        %963 = vmatpush.bf16.msra.mxu0 %v936
        %964 = vmatpush.bf16.msra.mxu0 %v934
        %965 = vmatmul.bf16.gmra.mxu0 %v942
        %v966 = vpop.f32.mrf.mxu0
        %v967 = vadd.f32 %v918, %v966
        %v968 = vpop.f32.mrf.mxu0
        %969 = vdwg.mxu0
        %v970 = vmax.f32 %v967, 0.0
        %v971 = vpack.c.bf16 %v970, %v970
        %v972 = vld [vmem:[%s13] sm:$0xf]
        %v973 = vld [vmem:[%s13 + $0x4] sm:$0xf]
        %v976 = vunpack.c.l.b16 %v972
        %v977 = vunpack.c.l.b16 %v973
        %v978 = vpack.c.b16 %v977, %v976
        %vm980 = vcmask 130048
        %v982 = vsel %vm980, %v971, 0
        %984 = vmatpush.bf16.msra.mxu0 0
        %985 = vmatpush.bf16.msra.mxu0 0
        %986 = vmatpush.bf16.msra.mxu0 0
        %987 = vmatpush.bf16.msra.mxu0 0
        %988 = vmatpush.bf16.msra.mxu0 0
        %989 = vmatpush.bf16.msra.mxu0 0
        %990 = vmatpush.bf16.msra.mxu0 0
        %991 = vmatpush.bf16.msra.mxu0 %v978
        %992 = vmatmul.bf16.gmra.mxu0 %v982
        %v993 = vpop.f32.mrf.mxu0
        %v994 = vadd.f32 0.0, %v993
        %v995 = vpop.f32.mrf.mxu0
        %996 = vdwg.mxu0
        %v997 = vadd.f32 %v954, %v994
        %v998 = vld [vmem:[%s14] sm:$0x1]
        %v1000 = vperm.slane %v998, 0
        %v1002 = vadd.f32 %v997, %v1000
        %1003 = vst [vmem:[%s599] sm:$0xff] %v1002
        %s1004 = sand.u32 %s372, 1
        %s1005 = scalar_lea.sflag [#allocation4], %s1004
        %s1006 = sand.u32 %s372, 1
        %s1007 = smul.addr %s1006, 8
        %s1008 = scalar_lea.vmem [#allocation10], %s1007
        %s1009 = sand.u32 %s398, 1
        %s1010 = scalar_lea.sflag [#allocation12], %s1009
        %s1011 = sand.u32 %s398, 1
        %s1012 = smul.addr %s1011, 8
        %s1013 = scalar_lea.vmem [#allocation11], %s1012
        // Predicated region
        $region97: #{tpu_custom_call.1} parent=79 // pred_check
          %p1014 = pneg %p382
        $region98: #{tpu_custom_call.1} parent=79 // pred_check_branch
          %1016 = sbr.rel (%p1014) target = $region100
        $region99: #{tpu_custom_call.1} parent=79 // pred_region
          %1018 = vsyncadd %s1005, 0
          %s1019 = smul.addr %s39, 8
          %s1020 = scalar_lea.hbm %s15, %s1019
          %s1022 = sshll.u32 %s1008, 4
          %s1023 = int_to_ptr.vmem [resolvable:$true] %s1022
          %s1024 = sshll.u32 %s1020, 4
          %s1025 = int_to_ptr.hbm [resolvable:$true] %s1024
          %1027 = dma.vmem_to_hbm [thread:$0]  %s1023, 128, %s1025, %s1005
        $region100: #{tpu_custom_call.1} parent=79 // pred_fallthru
          _
        // Predicated region
        $region101: #{tpu_custom_call.1} parent=79 // pred_check
          %p1028 = pneg %p408
        $region102: #{tpu_custom_call.1} parent=79 // pred_check_branch
          %1030 = sbr.rel (%p1028) target = $region104
        $region103: #{tpu_custom_call.1} parent=79 // pred_region
          %1032 = vsyncadd %s1010, 0
          %s1033 = smul.addr %s39, 8
          %s1034 = scalar_lea.hbm %s16, %s1033
          %s1036 = sshll.u32 %s1013, 4
          %s1037 = int_to_ptr.vmem [resolvable:$true] %s1036
          %s1038 = sshll.u32 %s1034, 4
          %s1039 = int_to_ptr.hbm [resolvable:$true] %s1038
          %1041 = dma.vmem_to_hbm [thread:$0]  %s1037, 128, %s1039, %s1010
        $region104: #{tpu_custom_call.1} parent=79 // pred_fallthru
          _
      $region80: #{tpu_custom_call.1} parent=5 // pred_fallthru
        _
      %p1042 = scmp.le.s32.totalorder 2, %s34
      // Predicated region
      $region105: #{tpu_custom_call.1} parent=5 // pred_check
        %p1043 = pneg %p1042
      $region106: #{tpu_custom_call.1} parent=5 // pred_check_branch
        %1045 = sbr.rel (%p1043) target = $region108
      $region107: #{tpu_custom_call.1} parent=5 // pred_region
        %s1046 = ssub.s32 %s34, 2
        // Predicated region
        $region109: #{tpu_custom_call.1} parent=107 // pred_check
          %p1047 = pneg %p388
        $region110: #{tpu_custom_call.1} parent=107 // pred_check_branch
          %1049 = sbr.rel (%p1047) target = $region112
        $region111: #{tpu_custom_call.1} parent=107 // pred_region
          %s1050 = sand.u32 %s373, 1
          %s1051 = scalar_lea.sflag [#allocation4], %s1050
          %s1052 = sand.u32 %s373, 1
          %s1053 = smul.addr %s1052, 8
          %s1054 = scalar_lea.vmem [#allocation10], %s1053
          %1056 = dma.done %s1051, 128
        $region112: #{tpu_custom_call.1} parent=107 // pred_fallthru
          _
        // Predicated region
        $region113: #{tpu_custom_call.1} parent=107 // pred_check
          %p1057 = pneg %p414
        $region114: #{tpu_custom_call.1} parent=107 // pred_check_branch
          %1059 = sbr.rel (%p1057) target = $region116
        $region115: #{tpu_custom_call.1} parent=107 // pred_region
          %s1060 = sand.u32 %s399, 1
          %s1061 = scalar_lea.sflag [#allocation12], %s1060
          %s1062 = sand.u32 %s399, 1
          %s1063 = smul.addr %s1062, 8
          %s1064 = scalar_lea.vmem [#allocation11], %s1063
          %1066 = dma.done %s1061, 128
        $region116: #{tpu_custom_call.1} parent=107 // pred_fallthru
          _
      $region108: #{tpu_custom_call.1} parent=5 // pred_fallthru
        _
    $region6: #{tpu_custom_call.1} parent=1 // loop_footer
      %s38 = sadd.s32 1, %s34
    $region7: #{tpu_custom_call.1} parent=1 // loop_footer_branch
      %33 = sbr.rel target = $region3
    $region8: #{tpu_custom_call.1} parent=1 // loop_exit
      _
    %1067 = vsyncpa [#allocation3], 1
    %s1068 = scalar_lea.sflag [#allocation3], 1
    %1069 = vsyncpa %s1068, 1
    %1070 = vsyncpa [#allocation6], 1
    %1071 = vsyncpa [#allocation9], 1
    %1072 = vsyncpa [#allocation4], 1
    %s1073 = scalar_lea.sflag [#allocation4], 1
    %1074 = vsyncpa %s1073, 1
    %1075 = vsyncpa [#allocation12], 1
    %s1076 = scalar_lea.sflag [#allocation12], 1
    %1077 = vsyncpa %s1076, 1

</llo_original>
